<compile_context>
chip_gen: v7x
topology: tpu7x:2x2x1
jax: 0.10.0
libtpu: 0.0.40
codegen_flags: <defaults>
</compile_context>

<pallas_src>
import functools

import jax
import jax.numpy as jnp
from jax import lax
from jax.experimental import pallas as pl
from jax.experimental.pallas import tpu as pltpu


def skipgram_kernel(in_vec_ref, out_w_ref, o_ref, m_ref, l_ref, *,
                    nv, tn, v_real, v_pad, resident):
    j = pl.program_id(1)          # 0..nv-1: online max/sum pass, nv..2*nv-1: write pass
    jv = j % nv                   # vocab tile index within the current pass

    @pl.when(j == 0)
    def _():                      # reset the online-softmax state once per batch tile
        m_ref[...] = jnp.full_like(m_ref, -jnp.inf)
        l_ref[...] = jnp.zeros_like(l_ref)

    if resident:                  # whole (padded) out_w lives in VMEM; slice this tile
        col0 = pl.multiple_of(jv * tn, tn)
        w_tile = out_w_ref[pl.ds(col0, tn), :]
    else:                         # streamed (tn, E) vocab tile
        w_tile = out_w_ref[...]

    # (tb, E) x (tn, E) -> (tb, tn): contract E on both operands (flash-attention NT form,
    # no transposed weight copy), bf16 MXU operands with f32 accumulation.
    # TODO(synk): if the Mosaic dump ever shows per-tile vxpose for this NT dot, store the
    # table pre-transposed as (E, V) and use standard (K, N) dimension_numbers instead.
    scores = lax.dot_general(
        in_vec_ref[...], w_tile,
        dimension_numbers=(((1,), (1,)), ((), ())),
        preferred_element_type=jnp.float32)

    if v_pad != v_real:           # mask padded vocab columns out of the softmax
        col_ids = jv * tn + lax.broadcasted_iota(jnp.int32, scores.shape, 1)
        scores = jnp.where(col_ids < v_real, scores, -jnp.inf)

    @pl.when(j < nv)
    def _():                      # pass 1: running max / sum(exp) over vocab tiles (f32)
        m_prev = m_ref[...]
        m_new = jnp.maximum(m_prev, jnp.max(scores, axis=-1, keepdims=True))
        l_ref[...] = (l_ref[...] * jnp.exp(m_prev - m_new)
                      + jnp.sum(jnp.exp(scores - m_new), axis=-1, keepdims=True))
        m_ref[...] = m_new

    @pl.when(j >= nv)
    def _():                      # pass 2: write normalized log-probs (lane-dense tiles)
        o_ref[...] = scores - m_ref[...] - jnp.log(l_ref[...])


def _round_up(x, m):
    return ((x + m - 1) // m) * m


def _vmem_budget_bytes():
    # Generation-aware budget: ~48 MiB on v7x (64 MiB/TC), ~96 MiB on v5e/v6e (128 MiB).
    try:
        cap = int(pltpu.get_tpu_info().vmem_capacity_bytes)
    except Exception:
        cap = 64 * 1024 * 1024          # conservative fallback (v7x per-TensorCore)
    return cap, (cap * 3) // 4


def skipgram_forward(target, in_w, out_w, *, max_tb=512, max_tn=2048):
    B = target.shape[0]
    V, E = in_w.shape

    # MXU operands are bf16 (accumulation / softmax math stay in f32 inside the kernel).
    # Pass bf16 tables so these casts are a no-op on the per-call path.
    if in_w.dtype != jnp.bfloat16:
        in_w = in_w.astype(jnp.bfloat16)
    if out_w.dtype != jnp.bfloat16:
        out_w = out_w.astype(jnp.bfloat16)

    vmem_cap, vmem_budget = _vmem_budget_bytes()

    # Batch tile: multiple of 16 (bf16 sublane packing); large so out_w streaming is
    # amortized, but keep >= 2 batch tiles when the batch is big so v7x megacore can
    # split the "parallel" axis across its two TensorCores.
    tb = min(max_tb, _round_up(B, 16))
    if B >= 256 and pl.cdiv(B, tb) < 2:
        tb = _round_up(pl.cdiv(B, 2), 16)
    nb = pl.cdiv(B, tb)
    Bp = nb * tb

    # Vocab tile: largest lane-dense (multiple-of-128) width whose streamed working set
    # (double-buffered in_vec tile + out_w tile + f32 output tile + scratch) fits VMEM.
    tn = 128
    for cand in (2048, 1024, 512, 256, 128):
        if cand > max_tn:
            continue
        need = 2 * tb * E * 2 + 2 * cand * E * 2 + 2 * tb * cand * 4 + 16 * tb
        if need <= vmem_budget:
            tn = cand
            break
    tn = min(tn, _round_up(V, 128))
    Vp = _round_up(V, tn)           # padded vocab (padded columns masked to -inf)
    nv = Vp // tn

    # Resident fast path: keep the whole (padded, bf16) out_w table in VMEM when it fits
    # (conservatively budgeted at 2 buffers), so it is fetched from HBM exactly once
    # instead of being re-streamed 2*nv times per batch tile.
    resident_need = 2 * Vp * E * 2 + 2 * tb * E * 2 + 2 * tb * tn * 4 + 16 * tb
    streaming_need = 2 * tb * E * 2 + 2 * tn * E * 2 + 2 * tb * tn * 4 + 16 * tb
    resident = resident_need <= vmem_budget
    need = resident_need if resident else streaming_need
    vmem_limit = int(min(vmem_cap, max(need + (16 << 20), 32 << 20)))

    # nn.Embedding lookup for the (padded) batch: a tiny XLA gather feeding the kernel as
    # a regular pipelined input (the pipeline prefetches it across batch tiles for free).
    tgt = jnp.zeros((Bp,), jnp.int32).at[:B].set(target.astype(jnp.int32))
    in_vec = jnp.take(in_w, tgt, axis=0)                       # (Bp, E) bf16

    out_w_p = out_w if Vp == V else jnp.zeros((Vp, E), out_w.dtype).at[:V, :].set(out_w)

    if resident:
        w_spec = pl.BlockSpec((Vp, E), lambda i, j: (0, 0))    # fetched once, stays in VMEM
    else:
        w_spec = pl.BlockSpec((tn, E), lambda i, j: (j % nv, 0))

    kernel = functools.partial(skipgram_kernel, nv=nv, tn=tn, v_real=V, v_pad=Vp,
                               resident=resident)

    out = pl.pallas_call(
        kernel,
        out_shape=jax.ShapeDtypeStruct((Bp, Vp), jnp.float32),
        grid_spec=pltpu.PrefetchScalarGridSpec(
            num_scalar_prefetch=0,
            grid=(nb, 2 * nv),
            in_specs=[
                pl.BlockSpec((tb, E), lambda i, j: (i, 0)),    # gathered in_vec rows
                w_spec,                                        # out_w (resident or streamed)
            ],
            out_specs=pl.BlockSpec(
                (tb, tn), lambda i, j: (i, jnp.maximum(j - nv, 0))),
            scratch_shapes=[
                pltpu.VMEM((tb, 1), jnp.float32),              # running max
                pltpu.VMEM((tb, 1), jnp.float32),              # running sum(exp)
            ]),
        compiler_params=pltpu.CompilerParams(
            dimension_semantics=("parallel", "arbitrary"),
            vmem_limit_bytes=vmem_limit),
    )(in_vec, out_w_p)

    return out[:B, :V]


if __name__ == "__main__":
    vocab_size, embed_size, batch = 64, 32, 16

    key = jax.random.PRNGKey(0)
    k1, k2, k3 = jax.random.split(key, 3)
    # nn.Embedding default init: N(0, 1)
    in_w = jax.random.normal(k1, (vocab_size, embed_size), dtype=jnp.float32)
    out_w = jax.random.normal(k2, (vocab_size, embed_size), dtype=jnp.float32)
    target = jax.random.randint(k3, (batch,), 0, vocab_size, dtype=jnp.int32)

    # Store the embedding tables in bf16 once, outside the per-call path.
    in_w_bf = in_w.astype(jnp.bfloat16)
    out_w_bf = out_w.astype(jnp.bfloat16)

    out = skipgram_forward(target, in_w_bf, out_w_bf)
    out = jax.block_until_ready(out)

    # Reference of the PyTorch forward using the same bf16-rounded MXU operands.
    ref = jax.nn.log_softmax(
        in_w_bf.astype(jnp.float32)[target] @ out_w_bf.astype(jnp.float32).T, axis=1)

    assert out.shape == (batch, vocab_size)
    assert jnp.allclose(out, ref, atol=2e-3, rtol=2e-3), float(jnp.max(jnp.abs(out - ref)))

    print("KERNEL_OK")
</pallas_src>

<mosaic_0001>
module attributes {stable_mosaic.version = 11 : i64} {
  func.func @skipgram_kernel(%arg0: i32, %arg1: i32, %arg2: memref<16x32xbf16, #tpu.memory_space<vmem>>, %arg3: memref<128x32xbf16, #tpu.memory_space<vmem>>, %arg4: memref<16x128xf32, #tpu.memory_space<vmem>>, %arg5: memref<16x1xf32, #tpu.memory_space<vmem>>, %arg6: memref<16x1xf32, #tpu.memory_space<vmem>>) attributes {dimension_semantics = [#tpu.dimension_semantics<parallel>, #tpu.dimension_semantics<arbitrary>], iteration_bounds = array<i64: 1, 2>, scalar_prefetch = 0 : i64, scratch_operands = 2 : i64, tpu.core_type = #tpu.core_type<tc>, window_params = [{transform_indices = @transform_0, window_bounds = array<i64: 16, 32>}, {pipeline_mode = #tpu.pipeline_mode<synchronous>, transform_indices = @transform_1, window_bounds = array<i64: 128, 32>}, {transform_indices = @transform_2, window_bounds = array<i64: 16, 128>}]} {
    %c1_i32 = arith.constant 1 : i32
    %c0_i32 = arith.constant 0 : i32
    %0 = arith.cmpi eq, %c1_i32, %c0_i32 : i32
    %c1_i32_0 = arith.constant 1 : i32
    %1 = arith.select %0, %c1_i32_0, %c1_i32 : i32
    %2 = arith.remsi %arg1, %1 : i32
    %c0_i32_1 = arith.constant 0 : i32
    %3 = arith.cmpi ne, %2, %c0_i32_1 : i32
    %c0_i32_2 = arith.constant 0 : i32
    %4 = arith.cmpi slt, %2, %c0_i32_2 : i32
    %c0_i32_3 = arith.constant 0 : i32
    %5 = arith.cmpi slt, %1, %c0_i32_3 : i32
    %6 = arith.xori %4, %5 : i1
    %7 = arith.andi %6, %3 : i1
    %8 = arith.addi %2, %1 : i32
    %9 = arith.select %7, %8, %2 : i32
    %c0_i32_4 = arith.constant 0 : i32
    %10 = arith.cmpi eq, %arg1, %c0_i32_4 : i32
    %11 = arith.extui %10 : i1 to i32
    %c0_i32_5 = arith.constant 0 : i32
    %12 = arith.cmpi ne, %11, %c0_i32_5 : i32
    scf.if %12 {
      %cst_14 = arith.constant 0xFF800000 : f32
      %33 = vector.broadcast %cst_14 : f32 to vector<16x1xf32>
      %c0_15 = arith.constant 0 : index
      %c0_16 = arith.constant 0 : index
      %34 = vector.load %arg5[%c0_15, %c0_16] : memref<16x1xf32, #tpu.memory_space<vmem>>, vector<16x1xf32>
      tpu.vector_store %arg5[%c0_15, %c0_16], %33 {strides = array<i32>} : memref<16x1xf32, #tpu.memory_space<vmem>>, vector<16x1xf32>,
      %cst_17 = arith.constant 0.000000e+00 : f32
      %35 = vector.broadcast %cst_17 : f32 to vector<16x1xf32>
      %c0_18 = arith.constant 0 : index
      %c0_19 = arith.constant 0 : index
      %36 = vector.load %arg6[%c0_18, %c0_19] : memref<16x1xf32, #tpu.memory_space<vmem>>, vector<16x1xf32>
      tpu.vector_store %arg6[%c0_18, %c0_19], %35 {strides = array<i32>} : memref<16x1xf32, #tpu.memory_space<vmem>>, vector<16x1xf32>,
    } else {
    }
    %c128_i32 = arith.constant 128 : i32
    %13 = arith.muli %9, %c128_i32 : i32
    %14 = tpu.assume_multiple %13, 128 : i32
    %15 = arith.index_cast %14 : i32 to index
    %c0 = arith.constant 0 : index
    %16 = vector.load %arg3[%15, %c0] : memref<128x32xbf16, #tpu.memory_space<vmem>>, vector<128x32xbf16>
    %c0_6 = arith.constant 0 : index
    %c0_7 = arith.constant 0 : index
    %17 = vector.load %arg2[%c0_6, %c0_7] : memref<16x32xbf16, #tpu.memory_space<vmem>>, vector<16x32xbf16>
    %cst = arith.constant dense<0.000000e+00> : vector<16x128xf32>
    %18 = tpu.matmul %17, %16, %cst {dimension_numbers = #tpu.dot_dimension_numbers<[1], [1], [0], [0], [0, 0, 1, 0], [], []>} : vector<16x32xbf16>, vector<128x32xbf16>, vector<16x128xf32> -> vector<16x128xf32>
    %c128_i32_8 = arith.constant 128 : i32
    %19 = arith.muli %9, %c128_i32_8 : i32
    %20 = tpu.iota {dimensions = array<i32: 1>} : vector<16x128xi32>
    %21 = vector.broadcast %19 : i32 to vector<16x128xi32>
    %22 = arith.addi %21, %20 : vector<16x128xi32>
    %c64_i32 = arith.constant 64 : i32
    %23 = vector.broadcast %c64_i32 : i32 to vector<16x128xi32>
    %24 = arith.cmpi slt, %22, %23 : vector<16x128xi32>
    %cst_9 = arith.constant 0xFF800000 : f32
    %25 = vector.broadcast %cst_9 : f32 to vector<16x128xf32>
    %26 = arith.select %24, %18, %25 : vector<16x128xi1>, vector<16x128xf32>
    %c1_i32_10 = arith.constant 1 : i32
    %27 = arith.cmpi slt, %arg1, %c1_i32_10 : i32
    %28 = arith.extui %27 : i1 to i32
    %c0_i32_11 = arith.constant 0 : i32
    %29 = arith.cmpi ne, %28, %c0_i32_11 : i32
    scf.if %29 {
      %c0_14 = arith.constant 0 : index
      %c0_15 = arith.constant 0 : index
      %33 = vector.load %arg5[%c0_14, %c0_15] : memref<16x1xf32, #tpu.memory_space<vmem>>, vector<16x1xf32>
      %cst_16 = arith.constant dense<0xFF800000> : vector<16xf32>
      %34 = vector.multi_reduction <maximumf>, %26, %cst_16 [1] : vector<16x128xf32> to vector<16xf32>
      %35 = vector.shape_cast %34 : vector<16xf32> to vector<16x1xf32>
      %36 = arith.maximumf %33, %35 : vector<16x1xf32>
      %c0_17 = arith.constant 0 : index
      %c0_18 = arith.constant 0 : index
      %37 = vector.load %arg6[%c0_17, %c0_18] : memref<16x1xf32, #tpu.memory_space<vmem>>, vector<16x1xf32>
      %38 = arith.subf %33, %36 : vector<16x1xf32>
      %39 = math.exp %38 : vector<16x1xf32>
      %40 = arith.mulf %37, %39 : vector<16x1xf32>
      %41 = vector.broadcast %36 : vector<16x1xf32> to vector<16x128xf32>
      %42 = arith.subf %26, %41 : vector<16x128xf32>
      %43 = math.exp %42 : vector<16x128xf32>
      %cst_19 = arith.constant dense<0.000000e+00> : vector<16xf32>
      %44 = vector.multi_reduction <add>, %43, %cst_19 [1] : vector<16x128xf32> to vector<16xf32>
      %45 = vector.shape_cast %44 : vector<16xf32> to vector<16x1xf32>
      %46 = arith.addf %40, %45 : vector<16x1xf32>
      %c0_20 = arith.constant 0 : index
      %c0_21 = arith.constant 0 : index
      %47 = vector.load %arg6[%c0_20, %c0_21] : memref<16x1xf32, #tpu.memory_space<vmem>>, vector<16x1xf32>
      tpu.vector_store %arg6[%c0_20, %c0_21], %46 {strides = array<i32>} : memref<16x1xf32, #tpu.memory_space<vmem>>, vector<16x1xf32>,
      %c0_22 = arith.constant 0 : index
      %c0_23 = arith.constant 0 : index
      %48 = vector.load %arg5[%c0_22, %c0_23] : memref<16x1xf32, #tpu.memory_space<vmem>>, vector<16x1xf32>
      tpu.vector_store %arg5[%c0_22, %c0_23], %36 {strides = array<i32>} : memref<16x1xf32, #tpu.memory_space<vmem>>, vector<16x1xf32>,
    } else {
    }
    %c1_i32_12 = arith.constant 1 : i32
    %30 = arith.cmpi sge, %arg1, %c1_i32_12 : i32
    %31 = arith.extui %30 : i1 to i32
    %c0_i32_13 = arith.constant 0 : i32
    %32 = arith.cmpi ne, %31, %c0_i32_13 : i32
    scf.if %32 {
      %c0_14 = arith.constant 0 : index
      %c0_15 = arith.constant 0 : index
      %33 = vector.load %arg5[%c0_14, %c0_15] : memref<16x1xf32, #tpu.memory_space<vmem>>, vector<16x1xf32>
      %34 = vector.broadcast %33 : vector<16x1xf32> to vector<16x128xf32>
      %35 = arith.subf %26, %34 : vector<16x128xf32>
      %c0_16 = arith.constant 0 : index
      %c0_17 = arith.constant 0 : index
      %36 = vector.load %arg6[%c0_16, %c0_17] : memref<16x1xf32, #tpu.memory_space<vmem>>, vector<16x1xf32>
      %37 = math.log %36 : vector<16x1xf32>
      %38 = vector.broadcast %37 : vector<16x1xf32> to vector<16x128xf32>
      %39 = arith.subf %35, %38 : vector<16x128xf32>
      %c0_18 = arith.constant 0 : index
      %c0_19 = arith.constant 0 : index
      %40 = vector.load %arg4[%c0_18, %c0_19] : memref<16x128xf32, #tpu.memory_space<vmem>>, vector<16x128xf32>
      tpu.vector_store %arg4[%c0_18, %c0_19], %39 {strides = array<i32>} : memref<16x128xf32, #tpu.memory_space<vmem>>, vector<16x128xf32>,
    } else {
    }
    return
  }
  func.func @transform_0(%arg0: i32, %arg1: i32) -> (i32, i32) {
    %c0_i32 = arith.constant 0 : i32
    %c0_i32_0 = arith.constant 0 : i32
    return %arg0, %c0_i32 : i32, i32
  }
  func.func @transform_1(%arg0: i32, %arg1: i32) -> (i32, i32) {
    %c0_i32 = arith.constant 0 : i32
    %c0_i32_0 = arith.constant 0 : i32
    %c0_i32_1 = arith.constant 0 : i32
    return %c0_i32, %c0_i32_0 : i32, i32
  }
  func.func @transform_2(%arg0: i32, %arg1: i32) -> (i32, i32) {
    %c1_i32 = arith.constant 1 : i32
    %0 = arith.subi %arg1, %c1_i32 : i32
    %c0_i32 = arith.constant 0 : i32
    %1 = arith.maxsi %0, %c0_i32 : i32
    %c0_i32_0 = arith.constant 0 : i32
    return %arg0, %1 : i32, i32
  }
}

</mosaic_0001>

<llo_original>
// kernel: tpu_custom_call.1
$region0: #{tpu_custom_call.1}
  #allocation0 [shape = 'u32[]', space=smem, size = 0x4, offset = 0x4, fixed_abs, tag = 'smem constant byte address 0x4 - core index']
  #allocation1 [shape = 'u32[144,128]{1,0:T(1,128)}', space=vmem, size = 0x12000, scoped, tag = 'internal scratch']
  #allocation2 [shape = 'f32[16,1]{1,0:T(8,128)}', space=vmem, size = 0x2000, scoped, tag = 'scratch operand']
  #allocation3 [shape = 'f32[16,1]{1,0:T(8,128)}', space=vmem, size = 0x2000, scoped, tag = 'scratch operand']
  %s0 = inlined_call_operand.vmem [shape: bf16[16,32], index: 0, kind: input, shape index: {}]
  %s1 = inlined_call_operand.vmem [shape: bf16[128,32], index: 1, kind: input, shape index: {}]
  %s2 = inlined_call_operand.hbm [shape: f32[16,128], index: 2, kind: output, shape index: {}]
  %s3 = sld [smem:[#allocation0]]
  $region53: #{tpu_custom_call.1} parent=0
    _
  %s5 = ssub.s32 1, %s3
  %s6 = scalar_select 0, %s5, %s3
  $region1: #{tpu_custom_call.1} parent=0
    #allocation4 [shape = 'u8[16384]{0}', space=vmem, size = 0x4000, scoped, tag = 'output window, operand 0']
    #allocation5 [shape = 's32[2]{0}', space=sflag, size = 0x8, scoped, tag = 'scoped memory for tpu_custom_call.1']
    %7 = vsyncpa [#allocation5], 0
    %s8 = scalar_lea.sflag [#allocation5], 1
    %9 = vsyncpa %s8, 0
    loop: start=0, step=1, limit=4
    $region2: #{tpu_custom_call.1} parent=1 // loop_pre_header
      _
    $region3: #{tpu_custom_call.1} parent=1 // loop_header
      %s11 = sphi 0, %s15
      %p12 = scmp.ge.s32.totalorder %s11, 4
      %s18 = sphi 0, %s30
      %s19 = sphi 0, %s26
      %s20 = sphi 0, %s18
      %s21 = sphi 0, %s19
      %s22 = sphi 0, %s20
      %s23 = sphi 0, %s21
      %s33 = sphi 0, %s35
      %s36 = sphi 0, %s33
      %s37 = sphi 0, %s36
      %s53 = sphi 0, %s37
      %s57 = sphi 0, %s57
      %s59 = sphi 0, %s57
      %s60 = sphi 0, %s59
      %s74 = sphi 0, %s60
      %s88 = sphi 0, %s90
      %s91 = sphi 0, %s88
      %s92 = sphi 0, %s91
      %s108 = sphi 0, %s92
    $region4: #{tpu_custom_call.1} parent=1 // loop_header_branch
      %14 = sbr.rel (%p12) target = $region8
    $region5: #{tpu_custom_call.1} parent=1 // loop_body
      %s16 = ssub.s32 %s11, 1
      %s17 = ssub.s32 %s11, 2
      %s24 = sadd.s32 1, %s19
      %p25 = scmp.ge.s32.totalorder %s24, 2
      %s26 = scalar_select %p25, 0, %s24
      %s27 = sadd.s32 1, %s18
      %s28 = scalar_select %p25, %s27, %s18
      %p29 = scmp.ge.s32.totalorder %s28, 1
      %s30 = scalar_select %p29, 0, %s28
      %s31 = ssub.s32 %s18, %s30
      %p32 = scmp.eq.s32.totalorder %s31, 0
      %s34 = sadd.s32 %s33, 1
      %s35 = scalar_select %p32, %s33, %s34
      %p38 = pneg %p32
      %p39 = scmp.eq.s32.totalorder %s11, 1
      %p40 = por %p38, %p39
      %p41 = scmp.ne.s32.totalorder %s33, %s36
      %p42 = scmp.eq.s32.totalorder %s11, 0
      %p43 = por %p41, %p42
      %p44 = scmp.ne.s32.totalorder %s33, %s36
      %p45 = scmp.eq.s32.totalorder %s16, 1
      %p46 = por %p44, %p45
      %p47 = scmp.ne.s32.totalorder %s36, %s37
      %p48 = scmp.eq.s32.totalorder %s16, 0
      %p49 = por %p47, %p48
      %p50 = scmp.ne.s32.totalorder %s36, %s37
      %p51 = scmp.eq.s32.totalorder %s17, 1
      %p52 = por %p50, %p51
      %p54 = scmp.ne.s32.totalorder %s37, %s53
      %p55 = scmp.eq.s32.totalorder %s17, 0
      %p56 = por %p54, %p55
      %s58 = sadd.s32 %s57, 1
      %p61 = scmp.eq.s32.totalorder %s11, 1
      %p62 = scmp.ne.s32.totalorder %s57, %s59
      %p63 = scmp.eq.s32.totalorder %s11, 0
      %p64 = por %p62, %p63
      %p65 = scmp.ne.s32.totalorder %s57, %s59
      %p66 = scmp.eq.s32.totalorder %s16, 1
      %p67 = por %p65, %p66
      %p68 = scmp.ne.s32.totalorder %s59, %s60
      %p69 = scmp.eq.s32.totalorder %s16, 0
      %p70 = por %p68, %p69
      %p71 = scmp.ne.s32.totalorder %s59, %s60
      %p72 = scmp.eq.s32.totalorder %s17, 1
      %p73 = por %p71, %p72
      %p75 = scmp.ne.s32.totalorder %s60, %s74
      %p76 = scmp.eq.s32.totalorder %s17, 0
      %p77 = por %p75, %p76
      %s78 = ssub.s32 %s19, 1
      %p79 = scmp.gt.s32.totalorder %s78, 0
      %s80 = scalar_select %p79, %s78, 0
      %s81 = ssub.s32 %s26, 1
      %p82 = scmp.gt.s32.totalorder %s81, 0
      %s83 = scalar_select %p82, %s81, 0
      %s84 = ssub.s32 %s18, %s30
      %s85 = ssub.s32 %s80, %s83
      %s86 = sor.u32 %s84, %s85
      %p87 = scmp.eq.s32.totalorder %s86, 0
      %s89 = sadd.s32 %s88, 1
      %s90 = scalar_select %p87, %s88, %s89
      %p93 = pneg %p87
      %p94 = scmp.eq.s32.totalorder %s11, 1
      %p95 = por %p93, %p94
      %p96 = scmp.ne.s32.totalorder %s88, %s91
      %p97 = scmp.eq.s32.totalorder %s11, 0
      %p98 = por %p96, %p97
      %p99 = scmp.ne.s32.totalorder %s88, %s91
      %p100 = scmp.eq.s32.totalorder %s16, 1
      %p101 = por %p99, %p100
      %p102 = scmp.ne.s32.totalorder %s91, %s92
      %p103 = scmp.eq.s32.totalorder %s16, 0
      %p104 = por %p102, %p103
      %p105 = scmp.ne.s32.totalorder %s91, %s92
      %p106 = scmp.eq.s32.totalorder %s17, 1
      %p107 = por %p105, %p106
      %p109 = scmp.ne.s32.totalorder %s92, %s108
      %p110 = scmp.eq.s32.totalorder %s17, 0
      %p111 = por %p109, %p110
      %p112 = scmp.le.s32.totalorder 1, %s11
      %p113 = scmp.lt.s32.totalorder %s11, 3
      %p114 = pnand %p112, %p113
      %p115 = pneg %p114
      // Predicated region
      $region9: #{tpu_custom_call.1} parent=5 // pred_check
        _
      $region10: #{tpu_custom_call.1} parent=5 // pred_check_branch
        %117 = sbr.rel (%p114) target = $region12
      $region11: #{tpu_custom_call.1} parent=5 // pred_region
        %s118 = ssub.s32 %s11, 1
        // Predicated region
        $region13: #{tpu_custom_call.1} parent=11 // pred_check
          %p119 = pneg %p49
        $region14: #{tpu_custom_call.1} parent=11 // pred_check_branch
          %121 = sbr.rel (%p119) target = $region16
        $region15: #{tpu_custom_call.1} parent=11 // pred_region
          %s122 = smul.u32 2, %s20
          %p123 = scmp.lt.s32.totalorder %s122, 1
          %s124 = scalar_select %p123, %s122, 1
          %s125 = smul.addr %s124, 4
          %s126 = scalar_lea.vmem %s0, %s125
          %s127 = smul.u32 2, %s20
        $region16: #{tpu_custom_call.1} parent=11 // pred_fallthru
          _
        // Predicated region
        $region17: #{tpu_custom_call.1} parent=11 // pred_check
          %p128 = pneg %p70
        $region18: #{tpu_custom_call.1} parent=11 // pred_check_branch
          %130 = sbr.rel (%p128) target = $region20
        $region19: #{tpu_custom_call.1} parent=11 // pred_region
          _
        $region20: #{tpu_custom_call.1} parent=11 // pred_fallthru
          _
      $region12: #{tpu_custom_call.1} parent=5 // pred_fallthru
        _
      %p131 = scmp.lt.s32.totalorder %s11, 2
      // Predicated region
      $region21: #{tpu_custom_call.1} parent=5 // pred_check
        %p132 = pneg %p131
      $region22: #{tpu_custom_call.1} parent=5 // pred_check_branch
        %134 = sbr.rel (%p132) target = $region24
      $region23: #{tpu_custom_call.1} parent=5 // pred_region
        _
      $region24: #{tpu_custom_call.1} parent=5 // pred_fallthru
        _
      %p135 = scmp.le.s32.totalorder 1, %s11
      %p136 = scmp.lt.s32.totalorder %s11, 3
      %p137 = pnand %p135, %p136
      %p138 = pneg %p137
      // Predicated region
      $region25: #{tpu_custom_call.1} parent=5 // pred_check
        _
      $region26: #{tpu_custom_call.1} parent=5 // pred_check_branch
        %140 = sbr.rel (%p137) target = $region28
      $region27: #{tpu_custom_call.1} parent=5 // pred_region
        %s141 = ssub.s32 %s11, 1
        %s142 = smul.u32 2, %s20
        %p143 = scmp.lt.s32.totalorder %s142, 1
        %s144 = scalar_select %p143, %s142, 1
        %s145 = smul.addr %s144, 4
        %s146 = scalar_lea.vmem %s0, %s145
        %p147 = pneg %p49
        %p148 = pneg %p46
        %p149 = pneg %p70
        %p150 = pneg %p67
        %p151 = pneg %p104
        %p152 = pneg %p101
        %s153 = sand.u32 %s91, 1
        %s154 = scalar_lea.sflag [#allocation5], %s153
        %s155 = sand.u32 %s91, 1
        %s156 = smul.addr %s155, 16
        %s157 = scalar_lea.vmem [#allocation4], %s156
        %s158 = smul.u32 2, %s20
        %p159 = scmp.lt.s32.totalorder %s158, 1
        %s160 = scalar_select %p159, %s158, 1
        %s161 = smul.addr %s160, 4
        %s162 = scalar_lea.vmem %s0, %s161
        %s163 = smul.u32 2, %s20
        %s164 = ssub.s32 %s21, 1
        %p165 = scmp.gt.s32.totalorder %s164, 0
        %s166 = scalar_select %p165, %s164, 0
        %s167 = smul.u32 2, %s20
        %p169 = scmp.eq.s32.totalorder %s21, 0
        // Predicated region
        $region29: #{tpu_custom_call.1} parent=27 // pred_check
          %p170 = pneg %p169
        $region30: #{tpu_custom_call.1} parent=27 // pred_check_branch
          %172 = sbr.rel (%p170) target = $region32
        $region31: #{tpu_custom_call.1} parent=27 // pred_region
          %vm173 = vcmask 7168
          %174 = vst.msk [vmem:[#allocation2] sm:$0xff] %vm173, -inf
          %175 = vst.msk [vmem:[#allocation2 + $0x8] sm:$0xff] %vm173, -inf
          %176 = vst.msk [vmem:[#allocation3] sm:$0xff] %vm173, 0.0
          %177 = vst.msk [vmem:[#allocation3 + $0x8] sm:$0xff] %vm173, 0.0
        $region32: #{tpu_custom_call.1} parent=27 // pred_fallthru
          _
        %v178 = vld [vmem:[%s1] sm:$0xf]
        %v179 = vld [vmem:[%s1 + $0x4] sm:$0xf]
        %v180 = vld [vmem:[%s1 + $0x8] sm:$0xf]
        %v181 = vld [vmem:[%s1 + $0xc] sm:$0xf]
        %v182 = vld [vmem:[%s1 + $0x10] sm:$0xf]
        %v183 = vld [vmem:[%s1 + $0x14] sm:$0xf]
        %v184 = vld [vmem:[%s1 + $0x18] sm:$0xf]
        %v185 = vld [vmem:[%s1 + $0x1c] sm:$0xf]
        %v186 = vld [vmem:[%s1 + $0x20] sm:$0xf]
        %v187 = vld [vmem:[%s1 + $0x24] sm:$0xf]
        %v188 = vld [vmem:[%s1 + $0x28] sm:$0xf]
        %v189 = vld [vmem:[%s1 + $0x2c] sm:$0xf]
        %v190 = vld [vmem:[%s1 + $0x30] sm:$0xf]
        %v191 = vld [vmem:[%s1 + $0x34] sm:$0xf]
        %v192 = vld [vmem:[%s1 + $0x38] sm:$0xf]
        %v193 = vld [vmem:[%s1 + $0x3c] sm:$0xf]
        %v194 = vld [vmem:[%s162] sm:$0xf]
        %v195 = vld [vmem:[%s162 + $0x4] sm:$0xf]
        %v198 = vunpack.c.l.b16 %v194
        %v199 = vunpack.c.l.b16 %v195
        %v200 = vpack.c.b16 %v199, %v198
        %v217 = vunpack.c.l.b16 %v178
        %v218 = vunpack.c.l.b16 %v179
        %v219 = vunpack.c.l.b16 %v180
        %v220 = vunpack.c.l.b16 %v181
        %v221 = vunpack.c.l.b16 %v182
        %v222 = vunpack.c.l.b16 %v183
        %v223 = vunpack.c.l.b16 %v184
        %v224 = vunpack.c.l.b16 %v185
        %v225 = vunpack.c.l.b16 %v186
        %v226 = vunpack.c.l.b16 %v187
        %v227 = vunpack.c.l.b16 %v188
        %v228 = vunpack.c.l.b16 %v189
        %v229 = vunpack.c.l.b16 %v190
        %v230 = vunpack.c.l.b16 %v191
        %v231 = vunpack.c.l.b16 %v192
        %v232 = vunpack.c.l.b16 %v193
        %v233 = vpack.c.b16 %v218, %v217
        %v234 = vpack.c.b16 %v220, %v219
        %v235 = vpack.c.b16 %v222, %v221
        %v236 = vpack.c.b16 %v224, %v223
        %v237 = vpack.c.b16 %v226, %v225
        %v238 = vpack.c.b16 %v228, %v227
        %v239 = vpack.c.b16 %v230, %v229
        %v240 = vpack.c.b16 %v232, %v231
        %vm241 = vcmask 261120
        %v243 = vsel %vm241, %v200, 0
        %v246 = vsel %vm241, %v233, 0
        %v249 = vsel %vm241, %v234, 0
        %v252 = vsel %vm241, %v235, 0
        %v255 = vsel %vm241, %v236, 0
        %v258 = vsel %vm241, %v237, 0
        %v261 = vsel %vm241, %v238, 0
        %v264 = vsel %vm241, %v239, 0
        %v267 = vsel %vm241, %v240, 0
        %269 = vmatprep.subr.bf16.mxu0 0
        %270 = vmatpush1.bf16.xpose.msra.mxu0 %v246
        %271 = vmatprep.subr.bf16.mxu0 0
        %272 = vmatpush1.bf16.xpose.msra.mxu0 %v249
        %273 = vmatprep.subr.bf16.mxu0 0
        %274 = vmatpush1.bf16.xpose.msra.mxu0 %v252
        %275 = vmatprep.subr.bf16.mxu0 0
        %276 = vmatpush1.bf16.xpose.msra.mxu0 %v255
        %277 = vmatprep.subr.bf16.mxu0 0
        %278 = vmatpush1.bf16.xpose.msra.mxu0 %v258
        %279 = vmatprep.subr.bf16.mxu0 0
        %280 = vmatpush1.bf16.xpose.msra.mxu0 %v261
        %281 = vmatprep.subr.bf16.mxu0 0
        %282 = vmatpush1.bf16.xpose.msra.mxu0 %v264
        %283 = vmatprep.subr.bf16.mxu0 0
        %284 = vmatpush1.bf16.xpose.msra.mxu0 %v267
        %285 = vmatprep.subr.bf16.mxu0 0
        %286 = vmatpush1.bf16.xpose.msra.mxu0 0
        %287 = vmatprep.subr.bf16.mxu0 0
        %288 = vmatpush1.bf16.xpose.msra.mxu0 0
        %289 = vmatprep.subr.bf16.mxu0 0
        %290 = vmatpush1.bf16.xpose.msra.mxu0 0
        %291 = vmatprep.subr.bf16.mxu0 0
        %292 = vmatpush1.bf16.xpose.msra.mxu0 0
        %293 = vmatprep.subr.bf16.mxu0 0
        %294 = vmatpush1.bf16.xpose.msra.mxu0 0
        %295 = vmatprep.subr.bf16.mxu0 0
        %296 = vmatpush1.bf16.xpose.msra.mxu0 0
        %297 = vmatprep.subr.bf16.mxu0 0
        %298 = vmatpush1.bf16.xpose.msra.mxu0 0
        %299 = vmatprep.subr.bf16.mxu0 0
        %300 = vmatpush1.bf16.xpose.msra.mxu0 0
        %301 = vmatprep.mubr.bf16.mxu0 0
        %302 = vmatmul.mubr.bf16.gmra.mrb[0].mxu0 %v243
        %v303 = vpop.f32.mrb[0].mxu0
        %v304 = vadd.f32 0.0, %v303
        %v305 = vpop.f32.mrb[0].mxu0
        %v306 = vpop.f32.mrb[0].mxu0
        %v307 = vadd.f32 0.0, %v306
        %v308 = vpop.f32.mrb[0].mxu0
        %309 = vdwg.mxu0
        %v310 = vlaneseq
        %v311 = vand.u32 %v310, 127
        %vm312 = vcmp.lt.s32.totalorder %v311, 64
        %v313 = vsel %vm312, %v304, -inf
        %v314 = vsel %vm312, %v307, -inf
        %p315 = scmp.lt.s32.totalorder %s21, 1
        // Predicated region
        $region33: #{tpu_custom_call.1} parent=27 // pred_check
          %p316 = pneg %p315
        $region34: #{tpu_custom_call.1} parent=27 // pred_check_branch
          %318 = sbr.rel (%p316) target = $region36
        $region35: #{tpu_custom_call.1} parent=27 // pred_region
          %v319 = vld [vmem:[#allocation2] sm:$0xff]
          %v320 = vld [vmem:[#allocation2 + $0x8] sm:$0xff]
          %321 = vmax.xlane.f32.xlu0 %v313
          %v322 = vpop.xlane.xlu0 %321
          %323 = vmax.xlane.f32.xlu0 %v314
          %v324 = vpop.xlane.xlu0 %323
          %v325 = vmax.f32 %v319, %v322
          %v326 = vmax.f32 %v320, %v324
          %v327 = vld [vmem:[#allocation3] sm:$0xff]
          %v328 = vld [vmem:[#allocation3 + $0x8] sm:$0xff]
          %v329 = vsub.f32 %v319, %v325
          %v330 = vsub.f32 %v320, %v326
          %v331 = vmul.f32 %v329, 1.442695
          %v332 = vpow.pop %v331
          %v333 = vmul.f32 %v330, 1.442695
          %v334 = vpow.pop %v333
          %v335 = vmul.f32 %v327, %v332
          %v336 = vmul.f32 %v328, %v334
          %338 = vset.pattern.permute.xlu0 0
          %339 = vperm.xlu0 %338, %v325
          %v340 = vpop.permute.xlu0 %339
          %343 = vset.pattern.permute.xlu0 0
          %344 = vperm.xlu0 %343, %v326
          %v345 = vpop.permute.xlu0 %344
          %v347 = vsub.f32 %v313, %v340
          %v348 = vsub.f32 %v314, %v345
          %v349 = vmul.f32 %v347, 1.442695
          %v350 = vpow.pop %v349
          %v351 = vmul.f32 %v348, 1.442695
          %v352 = vpow.pop %v351
          %353 = vadd.xlane.f32.xlu0 %v350
          %v354 = vpop.xlane.xlu0 %353
          %355 = vadd.xlane.f32.xlu0 %v352
          %v356 = vpop.xlane.xlu0 %355
          %v357 = vadd.f32 %v335, %v354
          %v358 = vadd.f32 %v336, %v356
          %vm359 = vcmask 7168
          %360 = vst.msk [vmem:[#allocation3] sm:$0xff] %vm359, %v357
          %361 = vst.msk [vmem:[#allocation3 + $0x8] sm:$0xff] %vm359, %v358
          %362 = vst.msk [vmem:[#allocation2] sm:$0xff] %vm359, %v325
          %363 = vst.msk [vmem:[#allocation2 + $0x8] sm:$0xff] %vm359, %v326
        $region36: #{tpu_custom_call.1} parent=27 // pred_fallthru
          _
        %p364 = scmp.ge.s32.totalorder %s21, 1
        // Predicated region
        $region37: #{tpu_custom_call.1} parent=27 // pred_check
          %p365 = pneg %p364
        $region38: #{tpu_custom_call.1} parent=27 // pred_check_branch
          %367 = sbr.rel (%p365) target = $region40
        $region39: #{tpu_custom_call.1} parent=27 // pred_region
          %v368 = vld [vmem:[#allocation2] sm:$0xff]
          %v369 = vld [vmem:[#allocation2 + $0x8] sm:$0xff]
          %371 = vset.pattern.permute.xlu0 0
          %372 = vperm.xlu0 %371, %v368
          %v373 = vpop.permute.xlu0 %372
          %376 = vset.pattern.permute.xlu0 0
          %377 = vperm.xlu0 %376, %v369
          %v378 = vpop.permute.xlu0 %377
          %v380 = vsub.f32 %v313, %v373
          %v381 = vsub.f32 %v314, %v378
          %v382 = vld [vmem:[#allocation3] sm:$0xff]
          %v383 = vld [vmem:[#allocation3 + $0x8] sm:$0xff]
          %v384 = vlog2.pop %v382
          %v385 = vmul.f32 %v384, 0.6931472
          %v386 = vlog2.pop %v383
          %v387 = vmul.f32 %v386, 0.6931472
          %389 = vset.pattern.permute.xlu0 0
          %390 = vperm.xlu0 %389, %v385
          %v391 = vpop.permute.xlu0 %390
          %394 = vset.pattern.permute.xlu0 0
          %395 = vperm.xlu0 %394, %v387
          %v396 = vpop.permute.xlu0 %395
          %v398 = vsub.f32 %v380, %v391
          %v399 = vsub.f32 %v381, %v396
          %400 = vst [vmem:[%s157] sm:$0xff] %v398
          %401 = vst [vmem:[%s157 + $0x8] sm:$0xff] %v399
        $region40: #{tpu_custom_call.1} parent=27 // pred_fallthru
          _
        %s402 = sand.u32 %s91, 1
        %s403 = scalar_lea.sflag [#allocation5], %s402
        %s404 = sand.u32 %s91, 1
        %s405 = smul.addr %s404, 16
        %s406 = scalar_lea.vmem [#allocation4], %s405
        // Predicated region
        $region41: #{tpu_custom_call.1} parent=27 // pred_check
          %p407 = pneg %p101
        $region42: #{tpu_custom_call.1} parent=27 // pred_check_branch
          %409 = sbr.rel (%p407) target = $region44
        $region43: #{tpu_custom_call.1} parent=27 // pred_region
          %s410 = ssub.s32 %s21, 1
          %p411 = scmp.gt.s32.totalorder %s410, 0
          %s412 = scalar_select %p411, %s410, 0
          %s413 = smul.u32 2, %s20
          %s415 = ssub.s32 256, 256
          %416 = vsyncadd %s403, %s415
          %s417 = sadd.s32 %s412, %s413
          %s418 = smul.addr %s417, 128
          %s419 = scalar_lea.hbm %s2, %s418
          %s420 = sshll.u32 %s406, 4
          %s421 = int_to_ptr.vmem [resolvable:$true] %s420
          %426 = dma.vmem_to_hbm [thread:$0]  %s421, 256, %s419, %s403, 128, 128, 8
        $region44: #{tpu_custom_call.1} parent=27 // pred_fallthru
          _
      $region28: #{tpu_custom_call.1} parent=5 // pred_fallthru
        _
      %p427 = scmp.le.s32.totalorder 2, %s11
      // Predicated region
      $region45: #{tpu_custom_call.1} parent=5 // pred_check
        %p428 = pneg %p427
      $region46: #{tpu_custom_call.1} parent=5 // pred_check_branch
        %430 = sbr.rel (%p428) target = $region48
      $region47: #{tpu_custom_call.1} parent=5 // pred_region
        %s431 = ssub.s32 %s11, 2
        // Predicated region
        $region49: #{tpu_custom_call.1} parent=47 // pred_check
          %p432 = pneg %p107
        $region50: #{tpu_custom_call.1} parent=47 // pred_check_branch
          %434 = sbr.rel (%p432) target = $region52
        $region51: #{tpu_custom_call.1} parent=47 // pred_region
          %s435 = sand.u32 %s92, 1
          %s436 = scalar_lea.sflag [#allocation5], %s435
          %s437 = sand.u32 %s92, 1
          %s438 = smul.addr %s437, 16
          %s439 = scalar_lea.vmem [#allocation4], %s438
          %440 = dma.done %s436, 256
        $region52: #{tpu_custom_call.1} parent=47 // pred_fallthru
          _
      $region48: #{tpu_custom_call.1} parent=5 // pred_fallthru
        _
    $region6: #{tpu_custom_call.1} parent=1 // loop_footer
      %s15 = sadd.s32 1, %s11
    $region7: #{tpu_custom_call.1} parent=1 // loop_footer_branch
      %10 = sbr.rel target = $region3
    $region8: #{tpu_custom_call.1} parent=1 // loop_exit
      _
    %441 = vsyncpa [#allocation5], 1
    %s442 = scalar_lea.sflag [#allocation5], 1
    %443 = vsyncpa %s442, 1

</llo_original>
